<compile_context>
chip_gen: v6e
topology: v6e:2x2x1
jax: 0.10.0
libtpu: 0.0.40
codegen_flags: <defaults>
</compile_context>

<pallas_src>
import functools

import numpy as np
import jax
import jax.numpy as jnp
from jax.experimental import pallas as pl
from jax.experimental.pallas import tpu as pltpu

NPERSEG = 8
NOVERLAP = 4
NFFT = 64
NFREQ = NFFT // 2 + 1      # 33 onesided rfft bins
BATCH_TILE = 8             # batch rows per grid step (sublane-aligned)


# ----------------------------- host-side tables -----------------------------
def _tukey_window(nperseg=NPERSEG, alpha=0.25):
    # scipy.signal.get_window(('tukey', 0.25), 8) (periodic / fftbins=True)
    m = nperseg + 1
    n = np.arange(m, dtype=np.float64)
    width = int(np.floor(alpha * (m - 1) / 2.0))
    w = np.ones(m, dtype=np.float64)
    n1 = n[: width + 1]
    n3 = n[m - width - 1:]
    w[: width + 1] = 0.5 * (1 + np.cos(np.pi * (-1 + 2.0 * n1 / alpha / (m - 1))))
    w[m - width - 1:] = 0.5 * (1 + np.cos(np.pi * (-2.0 / alpha + 1 + 2.0 * n3 / alpha / (m - 1))))
    return w[:-1]                                   # [0,1,1,1,1,1,1,1], float64


def _dft_matrices():
    # rfft of the length-8 windowed segment zero-padded to nfft=64.
    n = np.arange(NPERSEG, dtype=np.float64)[None, :]
    f = np.arange(NFREQ, dtype=np.float64)[:, None]
    ang = 2.0 * np.pi * f * n / NFFT
    return np.cos(ang), np.sin(ang)                 # (33, 8) float64


def _interp_matrix(out_size, in_size):
    # 1-D slice of PyTorch bilinear interpolation, align_corners=False.
    M = np.zeros((out_size, in_size), dtype=np.float64)
    if in_size == 1:
        M[:, 0] = 1.0
        return M
    scale = in_size / out_size
    for i in range(out_size):
        src = max((i + 0.5) * scale - 0.5, 0.0)
        x0 = min(int(np.floor(src)), in_size - 1)
        x1 = min(x0 + 1, in_size - 1)
        frac = src - x0
        M[i, x0] += 1.0 - frac
        M[i, x1] += frac
    return M


# ------------------------------- Pallas kernel -------------------------------
def _fused_kernel(segs_ref, cosT_ref, sinT_ref, m3_ref, b1_ref, w2_ref, b2_ref,
                  o_ref, *, n_seg, batch_tile):
    """segments -> magnitude STFT -> (folded interp + Linear) -> ReLU -> Linear."""
    segs = segs_ref[...]                                             # (T*BT, 8), rows = (t, b)
    # Window, constant detrend and density scale are folded into cosT/sinT.
    re = jnp.dot(segs, cosT_ref[...], preferred_element_type=jnp.float32)   # (T*BT, 33)
    im = jnp.dot(segs, sinT_ref[...], preferred_element_type=jnp.float32)
    mag = jnp.sqrt(re * re + im * im)                                # Sxx[f, t] per (t, b) row

    hidden = m3_ref.shape[-1]
    h = jnp.zeros((batch_tile, hidden), dtype=jnp.float32)
    # M3[t] = fold(bilinear-interp, 3x channel cat, first Linear); sum over t.
    for t in range(n_seg):                                           # static unroll, T small
        mag_t = mag[t * batch_tile:(t + 1) * batch_tile, :]          # (BT, 33), 8-aligned rows
        h = h + jnp.dot(mag_t, m3_ref[t], preferred_element_type=jnp.float32)

    h = jnp.maximum(h + b1_ref[...], 0.0)                            # ReLU
    o_ref[...] = jnp.dot(h, w2_ref[...],
                         preferred_element_type=jnp.float32) + b2_ref[...]


# --------------------------------- wrapper -----------------------------------
def spectrogram_forward(x, params):
    """Pallas equivalent of Spectrogram.forward. x: (B, C, L) float32."""
    B, _, L = x.shape
    assert L >= NPERSEG
    step = NPERSEG - NOVERLAP
    T = (L - NOVERLAP) // step                     # number of STFT segments
    D = L * L
    H = params["w1"].shape[1]
    C = params["w2"].shape[1]
    BT = BATCH_TILE
    G = -(-B // BT)                                # batch tiles (grid steps)
    BP = G * BT                                    # padded batch

    # ---- constant folding: window / detrend / scale into the DFT matrices ----
    win = _tukey_window()
    scale = np.sqrt(1.0 / (L * np.sum(win ** 2)))                  # density scaling
    cos_m, sin_m = _dft_matrices()
    detrend = np.eye(NPERSEG) - np.full((NPERSEG, NPERSEG), 1.0 / NPERSEG)
    cos_eff = (scale * cos_m * win[None, :]) @ detrend             # (33, 8)
    sin_eff = (scale * sin_m * win[None, :]) @ detrend
    cosT = jnp.asarray(cos_eff.T, jnp.float32)                     # (8, 33)
    sinT = jnp.asarray(sin_eff.T, jnp.float32)

    # ---- fold bilinear interp + 3x channel duplication + first Linear --------
    mf = jnp.asarray(_interp_matrix(L, NFREQ), jnp.float32)        # (L, 33) freq interp
    mtT = jnp.asarray(_interp_matrix(L, T).T, jnp.float32)         # (T, L)  time interp
    w1 = params["w1"]                                              # (3*L*L, H)
    w1_eff = w1[:D] + w1[D:2 * D] + w1[2 * D:]                     # 3 identical channels
    w1_3d = w1_eff.reshape(L, L, H)                                # (freq-row, time-col, H)
    hp = jax.lax.Precision.HIGHEST
    a_fold = jnp.einsum("rf,rch->fch", mf, w1_3d, precision=hp)    # (33, L, H)
    m3 = jnp.einsum("tc,fch->tfh", mtT, a_fold, precision=hp)      # (T, 33, H)

    # ---- segment extraction glue (tiny XLA gather; rows ordered (g, t, b)) ---
    sig = x[:, 0, :].astype(jnp.float32)           # reference uses Sxx[0] -> channel 0 only
    idx = step * jnp.arange(T)[:, None] + jnp.arange(NPERSEG)[None, :]     # (T, 8)
    segs = sig[:, idx]                                             # (B, T, 8)
    segs = jnp.pad(segs, ((0, BP - B), (0, 0), (0, 0)))            # pad batch to 8*G
    segs = segs.reshape(G, BT, T, NPERSEG).transpose(0, 2, 1, 3)
    segs = segs.reshape(G * T * BT, NPERSEG)                       # row = (g*T + t)*BT + b

    kernel = functools.partial(_fused_kernel, n_seg=T, batch_tile=BT)
    out = pl.pallas_call(
        kernel,
        out_shape=jax.ShapeDtypeStruct((BP, C), jnp.float32),
        grid=(G,),
        in_specs=[
            pl.BlockSpec((T * BT, NPERSEG), lambda g: (g, 0)),
            pl.BlockSpec((NPERSEG, NFREQ), lambda g: (0, 0)),
            pl.BlockSpec((NPERSEG, NFREQ), lambda g: (0, 0)),
            pl.BlockSpec((T, NFREQ, H), lambda g: (0, 0, 0)),
            pl.BlockSpec((1, H), lambda g: (0, 0)),
            pl.BlockSpec((H, C), lambda g: (0, 0)),
            pl.BlockSpec((1, C), lambda g: (0, 0)),
        ],
        out_specs=pl.BlockSpec((BT, C), lambda g: (g, 0)),
        compiler_params=pltpu.CompilerParams(
            dimension_semantics=("parallel",)),
    )(segs, cosT, sinT, m3, params["b1"], params["w2"], params["b2"])
    return out[:B]


def init_params(key, in_features, hidden, num_classes):
    # TODO(synk): the original base_model is an arbitrary external torchvision
    # network; it is replaced by a deterministic flatten->Linear->ReLU->Linear
    # stand-in whose final Linear maps to num_classes (cf. replace_last_layer).
    k1, k2, k3, k4 = jax.random.split(key, 4)
    lim1 = 1.0 / float(np.sqrt(in_features))
    lim2 = 1.0 / float(np.sqrt(hidden))
    return {
        "w1": jax.random.uniform(k1, (in_features, hidden), jnp.float32, -lim1, lim1),
        "b1": jax.random.uniform(k2, (1, hidden), jnp.float32, -lim1, lim1),
        "w2": jax.random.uniform(k3, (hidden, num_classes), jnp.float32, -lim2, lim2),
        "b2": jax.random.uniform(k4, (1, num_classes), jnp.float32, -lim2, lim2),
    }


# ------------------- numpy float64 reference (unfused path) -------------------
def _reference_forward_np(x, w1, b1, w2, b2):
    x = np.asarray(x, np.float64)
    w1 = np.asarray(w1, np.float64); b1 = np.asarray(b1, np.float64)
    w2 = np.asarray(w2, np.float64); b2 = np.asarray(b2, np.float64)
    B, _, L = x.shape
    step = NPERSEG - NOVERLAP
    T = (L - NOVERLAP) // step
    win = _tukey_window()
    scale = np.sqrt(1.0 / (L * np.sum(win ** 2)))
    cos_m, sin_m = _dft_matrices()
    mf = _interp_matrix(L, NFREQ)
    mtT = _interp_matrix(L, T).T
    outs = []
    for b in range(B):
        sig = x[b, 0]
        segs = np.stack([sig[t * step: t * step + NPERSEG] for t in range(T)], axis=1)
        segs = segs - segs.mean(axis=0, keepdims=True)        # detrend='constant'
        segs = segs * win[:, None]                            # tukey(0.25) window
        re = cos_m @ segs
        im = sin_m @ segs
        sxx = np.sqrt(re ** 2 + im ** 2) * scale              # (33, T) magnitude STFT
        img = mf @ sxx @ mtT                                  # bilinear resize to (L, L)
        feat = np.concatenate([img.reshape(-1)] * 3)          # cat 3 channels, NCHW flatten
        h = np.maximum(feat @ w1 + b1[0], 0.0)
        outs.append(h @ w2 + b2[0])
    return np.stack(outs)


if __name__ == "__main__":
    key = jax.random.PRNGKey(0)
    B, C, L = 2, 4, 32          # batch, signal channels, signal length
    hidden = 32
    num_classes = 10

    kx, kp = jax.random.split(key)
    x = jax.random.normal(kx, (B, C, L), dtype=jnp.float32)
    params = init_params(kp, in_features=3 * L * L, hidden=hidden,
                         num_classes=num_classes)

    logits = jax.jit(spectrogram_forward)(x, params)
    logits = jax.block_until_ready(logits)

    assert logits.shape == (B, num_classes)
    assert bool(jnp.all(jnp.isfinite(logits)))

    ref = _reference_forward_np(x, params["w1"], params["b1"],
                                params["w2"], params["b2"])
    assert np.allclose(ref, np.asarray(logits), rtol=2e-2, atol=5e-3), (
        "max abs err", float(np.max(np.abs(ref - np.asarray(logits)))))
    print("KERNEL_OK")
</pallas_src>

<mosaic_0001>
module attributes {stable_mosaic.version = 11 : i64} {
  func.func @_fused_kernel(%arg0: i32, %arg1: memref<56x8xf32, #tpu.memory_space<vmem>>, %arg2: memref<8x33xf32, #tpu.memory_space<vmem>>, %arg3: memref<8x33xf32, #tpu.memory_space<vmem>>, %arg4: memref<7x33x32xf32, #tpu.memory_space<vmem>>, %arg5: memref<1x32xf32, #tpu.memory_space<vmem>>, %arg6: memref<32x10xf32, #tpu.memory_space<vmem>>, %arg7: memref<1x10xf32, #tpu.memory_space<vmem>>, %arg8: memref<8x10xf32, #tpu.memory_space<vmem>>) attributes {dimension_semantics = [#tpu.dimension_semantics<parallel>], iteration_bounds = array<i64: 1>, scalar_prefetch = 0 : i64, scratch_operands = 0 : i64, tpu.core_type = #tpu.core_type<tc>, window_params = [{transform_indices = @transform_0, window_bounds = array<i64: 56, 8>}, {pipeline_mode = #tpu.pipeline_mode<synchronous>, transform_indices = @transform_1, window_bounds = array<i64: 8, 33>}, {pipeline_mode = #tpu.pipeline_mode<synchronous>, transform_indices = @transform_2, window_bounds = array<i64: 8, 33>}, {pipeline_mode = #tpu.pipeline_mode<synchronous>, transform_indices = @transform_3, window_bounds = array<i64: 7, 33, 32>}, {pipeline_mode = #tpu.pipeline_mode<synchronous>, transform_indices = @transform_4, window_bounds = array<i64: 1, 32>}, {pipeline_mode = #tpu.pipeline_mode<synchronous>, transform_indices = @transform_5, window_bounds = array<i64: 32, 10>}, {pipeline_mode = #tpu.pipeline_mode<synchronous>, transform_indices = @transform_6, window_bounds = array<i64: 1, 10>}, {transform_indices = @transform_7, window_bounds = array<i64: 8, 10>}]} {
    %c0 = arith.constant 0 : index
    %c0_0 = arith.constant 0 : index
    %0 = vector.load %arg1[%c0, %c0_0] : memref<56x8xf32, #tpu.memory_space<vmem>>, vector<56x8xf32>
    %c0_1 = arith.constant 0 : index
    %c0_2 = arith.constant 0 : index
    %1 = vector.load %arg2[%c0_1, %c0_2] : memref<8x33xf32, #tpu.memory_space<vmem>>, vector<8x33xf32>
    %cst = arith.constant dense<0.000000e+00> : vector<56x33xf32>
    %2 = tpu.matmul %0, %1, %cst {dimension_numbers = #tpu.dot_dimension_numbers<[1], [0], [0], [1], [0, 0, 1, 1], [], []>} : vector<56x8xf32>, vector<8x33xf32>, vector<56x33xf32> -> vector<56x33xf32>
    %c0_3 = arith.constant 0 : index
    %c0_4 = arith.constant 0 : index
    %3 = vector.load %arg3[%c0_3, %c0_4] : memref<8x33xf32, #tpu.memory_space<vmem>>, vector<8x33xf32>
    %cst_5 = arith.constant dense<0.000000e+00> : vector<56x33xf32>
    %4 = tpu.matmul %0, %3, %cst_5 {dimension_numbers = #tpu.dot_dimension_numbers<[1], [0], [0], [1], [0, 0, 1, 1], [], []>} : vector<56x8xf32>, vector<8x33xf32>, vector<56x33xf32> -> vector<56x33xf32>
    %5 = arith.mulf %2, %2 : vector<56x33xf32>
    %6 = arith.mulf %4, %4 : vector<56x33xf32>
    %7 = arith.addf %5, %6 : vector<56x33xf32>
    %8 = math.sqrt %7 : vector<56x33xf32>
    %cst_6 = arith.constant 0.000000e+00 : f32
    %9 = vector.broadcast %cst_6 : f32 to vector<8x32xf32>
    %10 = vector.extract_strided_slice %8 {offsets = [0, 0], sizes = [8, 33], strides = [1, 1]} : vector<56x33xf32> to vector<8x33xf32>
    %c0_7 = arith.constant 0 : index
    %c0_8 = arith.constant 0 : index
    %c0_9 = arith.constant 0 : index
    %11 = vector.load %arg4[%c0_7, %c0_8, %c0_9] : memref<7x33x32xf32, #tpu.memory_space<vmem>>, vector<1x33x32xf32>
    %12 = vector.shape_cast %11 : vector<1x33x32xf32> to vector<33x32xf32>
    %cst_10 = arith.constant dense<0.000000e+00> : vector<8x32xf32>
    %13 = tpu.matmul %10, %12, %cst_10 {dimension_numbers = #tpu.dot_dimension_numbers<[1], [0], [0], [1], [0, 0, 1, 1], [], []>} : vector<8x33xf32>, vector<33x32xf32>, vector<8x32xf32> -> vector<8x32xf32>
    %14 = arith.addf %9, %13 : vector<8x32xf32>
    %15 = vector.extract_strided_slice %8 {offsets = [8, 0], sizes = [8, 33], strides = [1, 1]} : vector<56x33xf32> to vector<8x33xf32>
    %c1 = arith.constant 1 : index
    %c0_11 = arith.constant 0 : index
    %c0_12 = arith.constant 0 : index
    %16 = vector.load %arg4[%c1, %c0_11, %c0_12] : memref<7x33x32xf32, #tpu.memory_space<vmem>>, vector<1x33x32xf32>
    %17 = vector.shape_cast %16 : vector<1x33x32xf32> to vector<33x32xf32>
    %cst_13 = arith.constant dense<0.000000e+00> : vector<8x32xf32>
    %18 = tpu.matmul %15, %17, %cst_13 {dimension_numbers = #tpu.dot_dimension_numbers<[1], [0], [0], [1], [0, 0, 1, 1], [], []>} : vector<8x33xf32>, vector<33x32xf32>, vector<8x32xf32> -> vector<8x32xf32>
    %19 = arith.addf %14, %18 : vector<8x32xf32>
    %20 = vector.extract_strided_slice %8 {offsets = [16, 0], sizes = [8, 33], strides = [1, 1]} : vector<56x33xf32> to vector<8x33xf32>
    %c2 = arith.constant 2 : index
    %c0_14 = arith.constant 0 : index
    %c0_15 = arith.constant 0 : index
    %21 = vector.load %arg4[%c2, %c0_14, %c0_15] : memref<7x33x32xf32, #tpu.memory_space<vmem>>, vector<1x33x32xf32>
    %22 = vector.shape_cast %21 : vector<1x33x32xf32> to vector<33x32xf32>
    %cst_16 = arith.constant dense<0.000000e+00> : vector<8x32xf32>
    %23 = tpu.matmul %20, %22, %cst_16 {dimension_numbers = #tpu.dot_dimension_numbers<[1], [0], [0], [1], [0, 0, 1, 1], [], []>} : vector<8x33xf32>, vector<33x32xf32>, vector<8x32xf32> -> vector<8x32xf32>
    %24 = arith.addf %19, %23 : vector<8x32xf32>
    %25 = vector.extract_strided_slice %8 {offsets = [24, 0], sizes = [8, 33], strides = [1, 1]} : vector<56x33xf32> to vector<8x33xf32>
    %c3 = arith.constant 3 : index
    %c0_17 = arith.constant 0 : index
    %c0_18 = arith.constant 0 : index
    %26 = vector.load %arg4[%c3, %c0_17, %c0_18] : memref<7x33x32xf32, #tpu.memory_space<vmem>>, vector<1x33x32xf32>
    %27 = vector.shape_cast %26 : vector<1x33x32xf32> to vector<33x32xf32>
    %cst_19 = arith.constant dense<0.000000e+00> : vector<8x32xf32>
    %28 = tpu.matmul %25, %27, %cst_19 {dimension_numbers = #tpu.dot_dimension_numbers<[1], [0], [0], [1], [0, 0, 1, 1], [], []>} : vector<8x33xf32>, vector<33x32xf32>, vector<8x32xf32> -> vector<8x32xf32>
    %29 = arith.addf %24, %28 : vector<8x32xf32>
    %30 = vector.extract_strided_slice %8 {offsets = [32, 0], sizes = [8, 33], strides = [1, 1]} : vector<56x33xf32> to vector<8x33xf32>
    %c4 = arith.constant 4 : index
    %c0_20 = arith.constant 0 : index
    %c0_21 = arith.constant 0 : index
    %31 = vector.load %arg4[%c4, %c0_20, %c0_21] : memref<7x33x32xf32, #tpu.memory_space<vmem>>, vector<1x33x32xf32>
    %32 = vector.shape_cast %31 : vector<1x33x32xf32> to vector<33x32xf32>
    %cst_22 = arith.constant dense<0.000000e+00> : vector<8x32xf32>
    %33 = tpu.matmul %30, %32, %cst_22 {dimension_numbers = #tpu.dot_dimension_numbers<[1], [0], [0], [1], [0, 0, 1, 1], [], []>} : vector<8x33xf32>, vector<33x32xf32>, vector<8x32xf32> -> vector<8x32xf32>
    %34 = arith.addf %29, %33 : vector<8x32xf32>
    %35 = vector.extract_strided_slice %8 {offsets = [40, 0], sizes = [8, 33], strides = [1, 1]} : vector<56x33xf32> to vector<8x33xf32>
    %c5 = arith.constant 5 : index
    %c0_23 = arith.constant 0 : index
    %c0_24 = arith.constant 0 : index
    %36 = vector.load %arg4[%c5, %c0_23, %c0_24] : memref<7x33x32xf32, #tpu.memory_space<vmem>>, vector<1x33x32xf32>
    %37 = vector.shape_cast %36 : vector<1x33x32xf32> to vector<33x32xf32>
    %cst_25 = arith.constant dense<0.000000e+00> : vector<8x32xf32>
    %38 = tpu.matmul %35, %37, %cst_25 {dimension_numbers = #tpu.dot_dimension_numbers<[1], [0], [0], [1], [0, 0, 1, 1], [], []>} : vector<8x33xf32>, vector<33x32xf32>, vector<8x32xf32> -> vector<8x32xf32>
    %39 = arith.addf %34, %38 : vector<8x32xf32>
    %40 = vector.extract_strided_slice %8 {offsets = [48, 0], sizes = [8, 33], strides = [1, 1]} : vector<56x33xf32> to vector<8x33xf32>
    %c6 = arith.constant 6 : index
    %c0_26 = arith.constant 0 : index
    %c0_27 = arith.constant 0 : index
    %41 = vector.load %arg4[%c6, %c0_26, %c0_27] : memref<7x33x32xf32, #tpu.memory_space<vmem>>, vector<1x33x32xf32>
    %42 = vector.shape_cast %41 : vector<1x33x32xf32> to vector<33x32xf32>
    %cst_28 = arith.constant dense<0.000000e+00> : vector<8x32xf32>
    %43 = tpu.matmul %40, %42, %cst_28 {dimension_numbers = #tpu.dot_dimension_numbers<[1], [0], [0], [1], [0, 0, 1, 1], [], []>} : vector<8x33xf32>, vector<33x32xf32>, vector<8x32xf32> -> vector<8x32xf32>
    %44 = arith.addf %39, %43 : vector<8x32xf32>
    %c0_29 = arith.constant 0 : index
    %c0_30 = arith.constant 0 : index
    %45 = vector.load %arg5[%c0_29, %c0_30] : memref<1x32xf32, #tpu.memory_space<vmem>>, vector<1x32xf32>
    %46 = vector.broadcast %45 : vector<1x32xf32> to vector<8x32xf32>
    %47 = arith.addf %44, %46 : vector<8x32xf32>
    %cst_31 = arith.constant 0.000000e+00 : f32
    %48 = vector.broadcast %cst_31 : f32 to vector<8x32xf32>
    %49 = arith.maximumf %47, %48 : vector<8x32xf32>
    %c0_32 = arith.constant 0 : index
    %c0_33 = arith.constant 0 : index
    %50 = vector.load %arg6[%c0_32, %c0_33] : memref<32x10xf32, #tpu.memory_space<vmem>>, vector<32x10xf32>
    %cst_34 = arith.constant dense<0.000000e+00> : vector<8x10xf32>
    %51 = tpu.matmul %49, %50, %cst_34 {dimension_numbers = #tpu.dot_dimension_numbers<[1], [0], [0], [1], [0, 0, 1, 1], [], []>} : vector<8x32xf32>, vector<32x10xf32>, vector<8x10xf32> -> vector<8x10xf32>
    %c0_35 = arith.constant 0 : index
    %c0_36 = arith.constant 0 : index
    %52 = vector.load %arg7[%c0_35, %c0_36] : memref<1x10xf32, #tpu.memory_space<vmem>>, vector<1x10xf32>
    %53 = vector.broadcast %52 : vector<1x10xf32> to vector<8x10xf32>
    %54 = arith.addf %51, %53 : vector<8x10xf32>
    %c0_37 = arith.constant 0 : index
    %c0_38 = arith.constant 0 : index
    %55 = vector.load %arg8[%c0_37, %c0_38] : memref<8x10xf32, #tpu.memory_space<vmem>>, vector<8x10xf32>
    tpu.vector_store %arg8[%c0_37, %c0_38], %54 {strides = array<i32>} : memref<8x10xf32, #tpu.memory_space<vmem>>, vector<8x10xf32>,
    return
  }
  func.func @transform_0(%arg0: i32) -> (i32, i32) {
    %c0_i32 = arith.constant 0 : i32
    %c0_i32_0 = arith.constant 0 : i32
    return %arg0, %c0_i32 : i32, i32
  }
  func.func @transform_1(%arg0: i32) -> (i32, i32) {
    %c0_i32 = arith.constant 0 : i32
    %c0_i32_0 = arith.constant 0 : i32
    %c0_i32_1 = arith.constant 0 : i32
    return %c0_i32, %c0_i32_0 : i32, i32
  }
  func.func @transform_2(%arg0: i32) -> (i32, i32) {
    %c0_i32 = arith.constant 0 : i32
    %c0_i32_0 = arith.constant 0 : i32
    %c0_i32_1 = arith.constant 0 : i32
    return %c0_i32, %c0_i32_0 : i32, i32
  }
  func.func @transform_3(%arg0: i32) -> (i32, i32, i32) {
    %c0_i32 = arith.constant 0 : i32
    %c0_i32_0 = arith.constant 0 : i32
    %c0_i32_1 = arith.constant 0 : i32
    %c0_i32_2 = arith.constant 0 : i32
    return %c0_i32, %c0_i32_0, %c0_i32_1 : i32, i32, i32
  }
  func.func @transform_4(%arg0: i32) -> (i32, i32) {
    %c0_i32 = arith.constant 0 : i32
    %c0_i32_0 = arith.constant 0 : i32
    %c0_i32_1 = arith.constant 0 : i32
    return %c0_i32, %c0_i32_0 : i32, i32
  }
  func.func @transform_5(%arg0: i32) -> (i32, i32) {
    %c0_i32 = arith.constant 0 : i32
    %c0_i32_0 = arith.constant 0 : i32
    %c0_i32_1 = arith.constant 0 : i32
    return %c0_i32, %c0_i32_0 : i32, i32
  }
  func.func @transform_6(%arg0: i32) -> (i32, i32) {
    %c0_i32 = arith.constant 0 : i32
    %c0_i32_0 = arith.constant 0 : i32
    %c0_i32_1 = arith.constant 0 : i32
    return %c0_i32, %c0_i32_0 : i32, i32
  }
  func.func @transform_7(%arg0: i32) -> (i32, i32) {
    %c0_i32 = arith.constant 0 : i32
    %c0_i32_0 = arith.constant 0 : i32
    return %arg0, %c0_i32 : i32, i32
  }
}

</mosaic_0001>

<llo_original>
// kernel: spectrogram_forward.1
$region0: #{spectrogram_forward.1}
  #allocation0 [shape = 'u32[]', space=smem, size = 0x4, offset = 0x4, fixed_abs, tag = 'smem constant byte address 0x4 - core index']
  #allocation1 [shape = 'u32[144,128]{1,0:T(1,128)}', space=vmem, size = 0x12000, scoped, tag = 'internal scratch']
  %s0 = inlined_call_operand.vmem [shape: f32[56,8], index: 0, kind: input, shape index: {}]
  %s1 = inlined_call_operand.vmem [shape: f32[8,33], index: 1, kind: input, shape index: {}]
  %s2 = inlined_call_operand.vmem [shape: f32[8,33], index: 2, kind: input, shape index: {}]
  %s3 = inlined_call_operand.vmem [shape: f32[7,33,32], index: 3, kind: input, shape index: {}]
  %s4 = inlined_call_operand.vmem [shape: f32[1,32], index: 4, kind: input, shape index: {}]
  %s5 = inlined_call_operand.vmem [shape: f32[32,10], index: 5, kind: input, shape index: {}]
  %s6 = inlined_call_operand.vmem [shape: f32[1,10], index: 6, kind: input, shape index: {}]
  %s7 = inlined_call_operand.vmem [shape: f32[8,10], index: 7, kind: output, shape index: {}]
  %s8 = sld [smem:[#allocation0]]
  $region38: #{spectrogram_forward.1} parent=0
    _
  %s10 = ssub.s32 1, %s8
  %s11 = scalar_select 0, %s10, %s8
  // Predicated region
  $region2: #{spectrogram_forward.1} parent=0 // pred_check
    _
  $region3: #{spectrogram_forward.1} parent=0 // pred_check_branch
    %13 = sbr.rel (0) target = $region5
  $region4: #{spectrogram_forward.1} parent=0 // pred_region
    _
  $region5: #{spectrogram_forward.1} parent=0 // pred_fallthru
    _
  // Predicated region
  $region6: #{spectrogram_forward.1} parent=0 // pred_check
    _
  $region7: #{spectrogram_forward.1} parent=0 // pred_check_branch
    %15 = sbr.rel (0) target = $region9
  $region8: #{spectrogram_forward.1} parent=0 // pred_region
    _
  $region9: #{spectrogram_forward.1} parent=0 // pred_fallthru
    _
  // Predicated region
  $region10: #{spectrogram_forward.1} parent=0 // pred_check
    _
  $region11: #{spectrogram_forward.1} parent=0 // pred_check_branch
    %17 = sbr.rel (0) target = $region13
  $region12: #{spectrogram_forward.1} parent=0 // pred_region
    _
  $region13: #{spectrogram_forward.1} parent=0 // pred_fallthru
    _
  // Predicated region
  $region14: #{spectrogram_forward.1} parent=0 // pred_check
    _
  $region15: #{spectrogram_forward.1} parent=0 // pred_check_branch
    %19 = sbr.rel (0) target = $region17
  $region16: #{spectrogram_forward.1} parent=0 // pred_region
    _
  $region17: #{spectrogram_forward.1} parent=0 // pred_fallthru
    _
  // Predicated region
  $region18: #{spectrogram_forward.1} parent=0 // pred_check
    _
  $region19: #{spectrogram_forward.1} parent=0 // pred_check_branch
    %21 = sbr.rel (0) target = $region21
  $region20: #{spectrogram_forward.1} parent=0 // pred_region
    _
  $region21: #{spectrogram_forward.1} parent=0 // pred_fallthru
    _
  // Predicated region
  $region22: #{spectrogram_forward.1} parent=0 // pred_check
    _
  $region23: #{spectrogram_forward.1} parent=0 // pred_check_branch
    %23 = sbr.rel (0) target = $region25
  $region24: #{spectrogram_forward.1} parent=0 // pred_region
    _
  $region25: #{spectrogram_forward.1} parent=0 // pred_fallthru
    _
  // Predicated region
  $region26: #{spectrogram_forward.1} parent=0 // pred_check
    _
  $region27: #{spectrogram_forward.1} parent=0 // pred_check_branch
    %25 = sbr.rel (0) target = $region29
  $region28: #{spectrogram_forward.1} parent=0 // pred_region
    _
  $region29: #{spectrogram_forward.1} parent=0 // pred_fallthru
    _
  %v26 = vld [vmem:[%s0] sm:$0xff]
  %v27 = vld [vmem:[%s0 + $0x8] sm:$0xff]
  %v28 = vld [vmem:[%s0 + $0x10] sm:$0xff]
  %v29 = vld [vmem:[%s0 + $0x18] sm:$0xff]
  %v30 = vld [vmem:[%s0 + $0x20] sm:$0xff]
  %v31 = vld [vmem:[%s0 + $0x28] sm:$0xff]
  %v32 = vld [vmem:[%s0 + $0x30] sm:$0xff]
  %v33 = vld [vmem:[%s1] sm:$0xff]
  %vm34 = vcmask 64512
  %v36 = vsel %vm34, %v26, 0
  %v39 = vsel %vm34, %v27, 0
  %v42 = vsel %vm34, %v28, 0
  %v45 = vsel %vm34, %v29, 0
  %v48 = vsel %vm34, %v30, 0
  %v51 = vsel %vm34, %v31, 0
  %v54 = vsel %vm34, %v32, 0
  %56 = vmatprep.subr.mxu0 0.0
  %57 = vmatpush1.msra.mxu0 0.0
  %58 = vmatprep.subr.mxu0 0.0
  %59 = vmatpush1.msra.mxu0 0.0
  %60 = vmatprep.subr.mxu0 0.0
  %61 = vmatpush1.msra.mxu0 0.0
  %62 = vmatprep.subr.mxu0 0.0
  %63 = vmatpush1.msra.mxu0 0.0
  %64 = vmatprep.subr.mxu0 0.0
  %65 = vmatpush1.msra.mxu0 0.0
  %66 = vmatprep.subr.mxu0 0.0
  %67 = vmatpush1.msra.mxu0 0.0
  %68 = vmatprep.subr.mxu0 0.0
  %69 = vmatpush1.msra.mxu0 0.0
  %70 = vmatprep.subr.mxu0 0.0
  %71 = vmatpush1.msra.mxu0 0.0
  %72 = vmatprep.subr.mxu0 0.0
  %73 = vmatpush1.msra.mxu0 0.0
  %74 = vmatprep.subr.mxu0 0.0
  %75 = vmatpush1.msra.mxu0 0.0
  %76 = vmatprep.subr.mxu0 0.0
  %77 = vmatpush1.msra.mxu0 0.0
  %78 = vmatprep.subr.mxu0 0.0
  %79 = vmatpush1.msra.mxu0 0.0
  %80 = vmatprep.subr.mxu0 0.0
  %81 = vmatpush1.msra.mxu0 0.0
  %82 = vmatprep.subr.mxu0 0.0
  %83 = vmatpush1.msra.mxu0 0.0
  %84 = vmatprep.subr.mxu0 0.0
  %85 = vmatpush1.msra.mxu0 0.0
  %86 = vmatprep.subr.mxu0 0.0
  %87 = vmatpush1.msra.mxu0 %v33
  %88 = vmatprep.subr.mxu0 0.0
  %89 = vmatpush2.msra.mxu0 0.0
  %90 = vmatprep.subr.mxu0 0.0
  %91 = vmatpush2.msra.mxu0 0.0
  %92 = vmatprep.subr.mxu0 0.0
  %93 = vmatpush2.msra.mxu0 0.0
  %94 = vmatprep.subr.mxu0 0.0
  %95 = vmatpush2.msra.mxu0 0.0
  %96 = vmatprep.subr.mxu0 0.0
  %97 = vmatpush2.msra.mxu0 0.0
  %98 = vmatprep.subr.mxu0 0.0
  %99 = vmatpush2.msra.mxu0 0.0
  %100 = vmatprep.subr.mxu0 0.0
  %101 = vmatpush2.msra.mxu0 0.0
  %102 = vmatprep.subr.mxu0 0.0
  %103 = vmatpush2.msra.mxu0 0.0
  %104 = vmatprep.subr.mxu0 0.0
  %105 = vmatpush2.msra.mxu0 0.0
  %106 = vmatprep.subr.mxu0 0.0
  %107 = vmatpush2.msra.mxu0 0.0
  %108 = vmatprep.subr.mxu0 0.0
  %109 = vmatpush2.msra.mxu0 0.0
  %110 = vmatprep.subr.mxu0 0.0
  %111 = vmatpush2.msra.mxu0 0.0
  %112 = vmatprep.subr.mxu0 0.0
  %113 = vmatpush2.msra.mxu0 0.0
  %114 = vmatprep.subr.mxu0 0.0
  %115 = vmatpush2.msra.mxu0 0.0
  %116 = vmatprep.subr.mxu0 0.0
  %117 = vmatpush2.msra.mxu0 0.0
  %118 = vmatprep.subr.mxu0 0.0
  %119 = vmatpush2.msra.mxu0 0.0
  %120 = vmatprep.mubr.f32.mxu0 0.0
  %121 = vmatmul.mubr.f32.gmra.mxu0 %v36
  %v122 = vpop.f32.mrf.mxu0
  %v123 = vadd.f32 0.0, %v122
  %v124 = vpop.f32.mrf.mxu0
  %125 = vmatprep.mubr.f32.mxu0 0.0
  %126 = vmatmul.mubr.f32.gmra.mxu0 %v39
  %v127 = vpop.f32.mrf.mxu0
  %v128 = vadd.f32 0.0, %v127
  %v129 = vpop.f32.mrf.mxu0
  %130 = vmatprep.mubr.f32.mxu0 0.0
  %131 = vmatmul.mubr.f32.gmra.mxu0 %v42
  %v132 = vpop.f32.mrf.mxu0
  %v133 = vadd.f32 0.0, %v132
  %v134 = vpop.f32.mrf.mxu0
  %135 = vmatprep.mubr.f32.mxu0 0.0
  %136 = vmatmul.mubr.f32.gmra.mxu0 %v45
  %v137 = vpop.f32.mrf.mxu0
  %v138 = vadd.f32 0.0, %v137
  %v139 = vpop.f32.mrf.mxu0
  %140 = vmatprep.mubr.f32.mxu0 0.0
  %141 = vmatmul.mubr.f32.gmra.mxu0 %v48
  %v142 = vpop.f32.mrf.mxu0
  %v143 = vadd.f32 0.0, %v142
  %v144 = vpop.f32.mrf.mxu0
  %145 = vmatprep.mubr.f32.mxu0 0.0
  %146 = vmatmul.mubr.f32.gmra.mxu0 %v51
  %v147 = vpop.f32.mrf.mxu0
  %v148 = vadd.f32 0.0, %v147
  %v149 = vpop.f32.mrf.mxu0
  %150 = vmatprep.mubr.f32.mxu0 0.0
  %151 = vmatmul.mubr.f32.gmra.mxu0 %v54
  %v152 = vpop.f32.mrf.mxu0
  %v153 = vadd.f32 0.0, %v152
  %v154 = vpop.f32.mrf.mxu0
  %155 = vdwg.mxu0
  %v156 = vld [vmem:[%s2] sm:$0xff]
  %157 = vmatprep.subr.mxu0 0.0
  %158 = vmatpush1.msra.mxu0 0.0
  %159 = vmatprep.subr.mxu0 0.0
  %160 = vmatpush1.msra.mxu0 0.0
  %161 = vmatprep.subr.mxu0 0.0
  %162 = vmatpush1.msra.mxu0 0.0
  %163 = vmatprep.subr.mxu0 0.0
  %164 = vmatpush1.msra.mxu0 0.0
  %165 = vmatprep.subr.mxu0 0.0
  %166 = vmatpush1.msra.mxu0 0.0
  %167 = vmatprep.subr.mxu0 0.0
  %168 = vmatpush1.msra.mxu0 0.0
  %169 = vmatprep.subr.mxu0 0.0
  %170 = vmatpush1.msra.mxu0 0.0
  %171 = vmatprep.subr.mxu0 0.0
  %172 = vmatpush1.msra.mxu0 0.0
  %173 = vmatprep.subr.mxu0 0.0
  %174 = vmatpush1.msra.mxu0 0.0
  %175 = vmatprep.subr.mxu0 0.0
  %176 = vmatpush1.msra.mxu0 0.0
  %177 = vmatprep.subr.mxu0 0.0
  %178 = vmatpush1.msra.mxu0 0.0
  %179 = vmatprep.subr.mxu0 0.0
  %180 = vmatpush1.msra.mxu0 0.0
  %181 = vmatprep.subr.mxu0 0.0
  %182 = vmatpush1.msra.mxu0 0.0
  %183 = vmatprep.subr.mxu0 0.0
  %184 = vmatpush1.msra.mxu0 0.0
  %185 = vmatprep.subr.mxu0 0.0
  %186 = vmatpush1.msra.mxu0 0.0
  %187 = vmatprep.subr.mxu0 0.0
  %188 = vmatpush1.msra.mxu0 %v156
  %189 = vmatprep.subr.mxu0 0.0
  %190 = vmatpush2.msra.mxu0 0.0
  %191 = vmatprep.subr.mxu0 0.0
  %192 = vmatpush2.msra.mxu0 0.0
  %193 = vmatprep.subr.mxu0 0.0
  %194 = vmatpush2.msra.mxu0 0.0
  %195 = vmatprep.subr.mxu0 0.0
  %196 = vmatpush2.msra.mxu0 0.0
  %197 = vmatprep.subr.mxu0 0.0
  %198 = vmatpush2.msra.mxu0 0.0
  %199 = vmatprep.subr.mxu0 0.0
  %200 = vmatpush2.msra.mxu0 0.0
  %201 = vmatprep.subr.mxu0 0.0
  %202 = vmatpush2.msra.mxu0 0.0
  %203 = vmatprep.subr.mxu0 0.0
  %204 = vmatpush2.msra.mxu0 0.0
  %205 = vmatprep.subr.mxu0 0.0
  %206 = vmatpush2.msra.mxu0 0.0
  %207 = vmatprep.subr.mxu0 0.0
  %208 = vmatpush2.msra.mxu0 0.0
  %209 = vmatprep.subr.mxu0 0.0
  %210 = vmatpush2.msra.mxu0 0.0
  %211 = vmatprep.subr.mxu0 0.0
  %212 = vmatpush2.msra.mxu0 0.0
  %213 = vmatprep.subr.mxu0 0.0
  %214 = vmatpush2.msra.mxu0 0.0
  %215 = vmatprep.subr.mxu0 0.0
  %216 = vmatpush2.msra.mxu0 0.0
  %217 = vmatprep.subr.mxu0 0.0
  %218 = vmatpush2.msra.mxu0 0.0
  %219 = vmatprep.subr.mxu0 0.0
  %220 = vmatpush2.msra.mxu0 0.0
  %221 = vmatprep.mubr.f32.mxu0 0.0
  %222 = vmatmul.mubr.f32.gmra.mxu0 %v36
  %v223 = vpop.f32.mrf.mxu0
  %v224 = vadd.f32 0.0, %v223
  %v225 = vpop.f32.mrf.mxu0
  %226 = vmatprep.mubr.f32.mxu0 0.0
  %227 = vmatmul.mubr.f32.gmra.mxu0 %v39
  %v228 = vpop.f32.mrf.mxu0
  %v229 = vadd.f32 0.0, %v228
  %v230 = vpop.f32.mrf.mxu0
  %231 = vmatprep.mubr.f32.mxu0 0.0
  %232 = vmatmul.mubr.f32.gmra.mxu0 %v42
  %v233 = vpop.f32.mrf.mxu0
  %v234 = vadd.f32 0.0, %v233
  %v235 = vpop.f32.mrf.mxu0
  %236 = vmatprep.mubr.f32.mxu0 0.0
  %237 = vmatmul.mubr.f32.gmra.mxu0 %v45
  %v238 = vpop.f32.mrf.mxu0
  %v239 = vadd.f32 0.0, %v238
  %v240 = vpop.f32.mrf.mxu0
  %241 = vmatprep.mubr.f32.mxu0 0.0
  %242 = vmatmul.mubr.f32.gmra.mxu0 %v48
  %v243 = vpop.f32.mrf.mxu0
  %v244 = vadd.f32 0.0, %v243
  %v245 = vpop.f32.mrf.mxu0
  %246 = vmatprep.mubr.f32.mxu0 0.0
  %247 = vmatmul.mubr.f32.gmra.mxu0 %v51
  %v248 = vpop.f32.mrf.mxu0
  %v249 = vadd.f32 0.0, %v248
  %v250 = vpop.f32.mrf.mxu0
  %251 = vmatprep.mubr.f32.mxu0 0.0
  %252 = vmatmul.mubr.f32.gmra.mxu0 %v54
  %v253 = vpop.f32.mrf.mxu0
  %v254 = vadd.f32 0.0, %v253
  %v255 = vpop.f32.mrf.mxu0
  %256 = vdwg.mxu0
  %v257 = vmul.f32 %v123, %v123
  %v258 = vmul.f32 %v128, %v128
  %v259 = vmul.f32 %v133, %v133
  %v260 = vmul.f32 %v138, %v138
  %v261 = vmul.f32 %v143, %v143
  %v262 = vmul.f32 %v148, %v148
  %v263 = vmul.f32 %v153, %v153
  %v264 = vmul.f32 %v224, %v224
  %v265 = vmul.f32 %v229, %v229
  %v266 = vmul.f32 %v234, %v234
  %v267 = vmul.f32 %v239, %v239
  %v268 = vmul.f32 %v244, %v244
  %v269 = vmul.f32 %v249, %v249
  %v270 = vmul.f32 %v254, %v254
  %v271 = vadd.f32 %v257, %v264
  %v272 = vadd.f32 %v258, %v265
  %v273 = vadd.f32 %v259, %v266
  %v274 = vadd.f32 %v260, %v267
  %v275 = vadd.f32 %v261, %v268
  %v276 = vadd.f32 %v262, %v269
  %v277 = vadd.f32 %v263, %v270
  %v278 = vrsqrt.pop %v271
  %v279 = vmul.f32 %v271, %v278
  %vm280 = vcmp.eq.f32.partialorder %v271, inf
  %v281 = vsel %vm280, %v271, %v279
  %vm282 = vcmp.eq.f32.partialorder %v271, 0.0
  %v283 = vand.u32 %v271, 2147483648
  %v284 = vsel %vm282, %v283, %v281
  %v285 = vrsqrt.pop %v272
  %v286 = vmul.f32 %v272, %v285
  %vm287 = vcmp.eq.f32.partialorder %v272, inf
  %v288 = vsel %vm287, %v272, %v286
  %vm289 = vcmp.eq.f32.partialorder %v272, 0.0
  %v290 = vand.u32 %v272, 2147483648
  %v291 = vsel %vm289, %v290, %v288
  %v292 = vrsqrt.pop %v273
  %v293 = vmul.f32 %v273, %v292
  %vm294 = vcmp.eq.f32.partialorder %v273, inf
  %v295 = vsel %vm294, %v273, %v293
  %vm296 = vcmp.eq.f32.partialorder %v273, 0.0
  %v297 = vand.u32 %v273, 2147483648
  %v298 = vsel %vm296, %v297, %v295
  %v299 = vrsqrt.pop %v274
  %v300 = vmul.f32 %v274, %v299
  %vm301 = vcmp.eq.f32.partialorder %v274, inf
  %v302 = vsel %vm301, %v274, %v300
  %vm303 = vcmp.eq.f32.partialorder %v274, 0.0
  %v304 = vand.u32 %v274, 2147483648
  %v305 = vsel %vm303, %v304, %v302
  %v306 = vrsqrt.pop %v275
  %v307 = vmul.f32 %v275, %v306
  %vm308 = vcmp.eq.f32.partialorder %v275, inf
  %v309 = vsel %vm308, %v275, %v307
  %vm310 = vcmp.eq.f32.partialorder %v275, 0.0
  %v311 = vand.u32 %v275, 2147483648
  %v312 = vsel %vm310, %v311, %v309
  %v313 = vrsqrt.pop %v276
  %v314 = vmul.f32 %v276, %v313
  %vm315 = vcmp.eq.f32.partialorder %v276, inf
  %v316 = vsel %vm315, %v276, %v314
  %vm317 = vcmp.eq.f32.partialorder %v276, 0.0
  %v318 = vand.u32 %v276, 2147483648
  %v319 = vsel %vm317, %v318, %v316
  %v320 = vrsqrt.pop %v277
  %v321 = vmul.f32 %v277, %v320
  %vm322 = vcmp.eq.f32.partialorder %v277, inf
  %v323 = vsel %vm322, %v277, %v321
  %vm324 = vcmp.eq.f32.partialorder %v277, 0.0
  %v325 = vand.u32 %v277, 2147483648
  %v326 = vsel %vm324, %v325, %v323
  %v327 = vld [vmem:[%s3] sm:$0xff]
  %v328 = vld [vmem:[%s3 + $0x8] sm:$0xff]
  %v329 = vld [vmem:[%s3 + $0x10] sm:$0xff]
  %v330 = vld [vmem:[%s3 + $0x18] sm:$0xff]
  %v331 = vld [vmem:[%s3 + $0x20] sm:$0x1]
  %s332 = scalar_lea.vmem %s3, 40
  %v333 = vld [vmem:[%s332] sm:$0xff]
  %v334 = vld [vmem:[%s332 + $0x8] sm:$0xff]
  %v335 = vld [vmem:[%s332 + $0x10] sm:$0xff]
  %v336 = vld [vmem:[%s332 + $0x18] sm:$0xff]
  %v337 = vld [vmem:[%s332 + $0x20] sm:$0x1]
  %vm338 = vcmask 269312
  %v340 = vsel %vm338, %v291, 0
  %vm342 = vcmask 1040384
  %v344 = vsel %vm342, %v337, 0
  %346 = vmatprep.subr.mxu0 0.0
  %347 = vmatpush1.msra.mxu0 0.0
  %348 = vmatprep.subr.mxu0 0.0
  %349 = vmatpush1.msra.mxu0 0.0
  %350 = vmatprep.subr.mxu0 0.0
  %351 = vmatpush1.msra.mxu0 0.0
  %352 = vmatprep.subr.mxu0 0.0
  %353 = vmatpush1.msra.mxu0 0.0
  %354 = vmatprep.subr.mxu0 0.0
  %355 = vmatpush1.msra.mxu0 0.0
  %356 = vmatprep.subr.mxu0 0.0
  %357 = vmatpush1.msra.mxu0 0.0
  %358 = vmatprep.subr.mxu0 0.0
  %359 = vmatpush1.msra.mxu0 0.0
  %360 = vmatprep.subr.mxu0 0.0
  %361 = vmatpush1.msra.mxu0 0.0
  %362 = vmatprep.subr.mxu0 0.0
  %363 = vmatpush1.msra.mxu0 0.0
  %364 = vmatprep.subr.mxu0 0.0
  %365 = vmatpush1.msra.mxu0 0.0
  %366 = vmatprep.subr.mxu0 0.0
  %367 = vmatpush1.msra.mxu0 0.0
  %368 = vmatprep.subr.mxu0 0.0
  %369 = vmatpush1.msra.mxu0 %v344
  %370 = vmatprep.subr.mxu0 0.0
  %371 = vmatpush1.msra.mxu0 %v336
  %372 = vmatprep.subr.mxu0 0.0
  %373 = vmatpush1.msra.mxu0 %v335
  %374 = vmatprep.subr.mxu0 0.0
  %375 = vmatpush1.msra.mxu0 %v334
  %376 = vmatprep.subr.mxu0 0.0
  %377 = vmatpush1.msra.mxu0 %v333
  %378 = vmatprep.subr.mxu0 0.0
  %379 = vmatpush2.msra.mxu0 0.0
  %380 = vmatprep.subr.mxu0 0.0
  %381 = vmatpush2.msra.mxu0 0.0
  %382 = vmatprep.subr.mxu0 0.0
  %383 = vmatpush2.msra.mxu0 0.0
  %384 = vmatprep.subr.mxu0 0.0
  %385 = vmatpush2.msra.mxu0 0.0
  %386 = vmatprep.subr.mxu0 0.0
  %387 = vmatpush2.msra.mxu0 0.0
  %388 = vmatprep.subr.mxu0 0.0
  %389 = vmatpush2.msra.mxu0 0.0
  %390 = vmatprep.subr.mxu0 0.0
  %391 = vmatpush2.msra.mxu0 0.0
  %392 = vmatprep.subr.mxu0 0.0
  %393 = vmatpush2.msra.mxu0 0.0
  %394 = vmatprep.subr.mxu0 0.0
  %395 = vmatpush2.msra.mxu0 0.0
  %396 = vmatprep.subr.mxu0 0.0
  %397 = vmatpush2.msra.mxu0 0.0
  %398 = vmatprep.subr.mxu0 0.0
  %399 = vmatpush2.msra.mxu0 0.0
  %400 = vmatprep.subr.mxu0 0.0
  %401 = vmatpush2.msra.mxu0 0.0
  %402 = vmatprep.subr.mxu0 0.0
  %403 = vmatpush2.msra.mxu0 0.0
  %404 = vmatprep.subr.mxu0 0.0
  %405 = vmatpush2.msra.mxu0 0.0
  %406 = vmatprep.subr.mxu0 0.0
  %407 = vmatpush2.msra.mxu0 0.0
  %408 = vmatprep.subr.mxu0 0.0
  %409 = vmatpush2.msra.mxu0 0.0
  %410 = vmatprep.mubr.f32.mxu0 0.0
  %411 = vmatmul.mubr.f32.gmra.mxu0 %v340
  %v412 = vpop.f32.mrf.mxu0
  %v413 = vadd.f32 0.0, %v412
  %v414 = vpop.f32.mrf.mxu0
  %415 = vdwg.mxu0
  %v417 = vsel %vm338, %v284, 0
  %v420 = vsel %vm342, %v331, 0
  %422 = vmatprep.subr.mxu0 0.0
  %423 = vmatpush1.msra.mxu0 0.0
  %424 = vmatprep.subr.mxu0 0.0
  %425 = vmatpush1.msra.mxu0 0.0
  %426 = vmatprep.subr.mxu0 0.0
  %427 = vmatpush1.msra.mxu0 0.0
  %428 = vmatprep.subr.mxu0 0.0
  %429 = vmatpush1.msra.mxu0 0.0
  %430 = vmatprep.subr.mxu0 0.0
  %431 = vmatpush1.msra.mxu0 0.0
  %432 = vmatprep.subr.mxu0 0.0
  %433 = vmatpush1.msra.mxu0 0.0
  %434 = vmatprep.subr.mxu0 0.0
  %435 = vmatpush1.msra.mxu0 0.0
  %436 = vmatprep.subr.mxu0 0.0
  %437 = vmatpush1.msra.mxu0 0.0
  %438 = vmatprep.subr.mxu0 0.0
  %439 = vmatpush1.msra.mxu0 0.0
  %440 = vmatprep.subr.mxu0 0.0
  %441 = vmatpush1.msra.mxu0 0.0
  %442 = vmatprep.subr.mxu0 0.0
  %443 = vmatpush1.msra.mxu0 0.0
  %444 = vmatprep.subr.mxu0 0.0
  %445 = vmatpush1.msra.mxu0 %v420
  %446 = vmatprep.subr.mxu0 0.0
  %447 = vmatpush1.msra.mxu0 %v330
  %448 = vmatprep.subr.mxu0 0.0
  %449 = vmatpush1.msra.mxu0 %v329
  %450 = vmatprep.subr.mxu0 0.0
  %451 = vmatpush1.msra.mxu0 %v328
  %452 = vmatprep.subr.mxu0 0.0
  %453 = vmatpush1.msra.mxu0 %v327
  %454 = vmatprep.subr.mxu0 0.0
  %455 = vmatpush2.msra.mxu0 0.0
  %456 = vmatprep.subr.mxu0 0.0
  %457 = vmatpush2.msra.mxu0 0.0
  %458 = vmatprep.subr.mxu0 0.0
  %459 = vmatpush2.msra.mxu0 0.0
  %460 = vmatprep.subr.mxu0 0.0
  %461 = vmatpush2.msra.mxu0 0.0
  %462 = vmatprep.subr.mxu0 0.0
  %463 = vmatpush2.msra.mxu0 0.0
  %464 = vmatprep.subr.mxu0 0.0
  %465 = vmatpush2.msra.mxu0 0.0
  %466 = vmatprep.subr.mxu0 0.0
  %467 = vmatpush2.msra.mxu0 0.0
  %468 = vmatprep.subr.mxu0 0.0
  %469 = vmatpush2.msra.mxu0 0.0
  %470 = vmatprep.subr.mxu0 0.0
  %471 = vmatpush2.msra.mxu0 0.0
  %472 = vmatprep.subr.mxu0 0.0
  %473 = vmatpush2.msra.mxu0 0.0
  %474 = vmatprep.subr.mxu0 0.0
  %475 = vmatpush2.msra.mxu0 0.0
  %476 = vmatprep.subr.mxu0 0.0
  %477 = vmatpush2.msra.mxu0 0.0
  %478 = vmatprep.subr.mxu0 0.0
  %479 = vmatpush2.msra.mxu0 0.0
  %480 = vmatprep.subr.mxu0 0.0
  %481 = vmatpush2.msra.mxu0 0.0
  %482 = vmatprep.subr.mxu0 0.0
  %483 = vmatpush2.msra.mxu0 0.0
  %484 = vmatprep.subr.mxu0 0.0
  %485 = vmatpush2.msra.mxu0 0.0
  %486 = vmatprep.mubr.f32.mxu0 0.0
  %487 = vmatmul.mubr.f32.gmra.mxu0 %v417
  %v488 = vpop.f32.mrf.mxu0
  %v489 = vadd.f32 %v413, %v488
  %v490 = vpop.f32.mrf.mxu0
  %491 = vdwg.mxu0
  %s492 = scalar_lea.vmem %s3, 80
  %v493 = vld [vmem:[%s492] sm:$0xff]
  %v494 = vld [vmem:[%s492 + $0x8] sm:$0xff]
  %v495 = vld [vmem:[%s492 + $0x10] sm:$0xff]
  %v496 = vld [vmem:[%s492 + $0x18] sm:$0xff]
  %v497 = vld [vmem:[%s492 + $0x20] sm:$0x1]
  %v499 = vsel %vm338, %v298, 0
  %v502 = vsel %vm342, %v497, 0
  %504 = vmatprep.subr.mxu0 0.0
  %505 = vmatpush1.msra.mxu0 0.0
  %506 = vmatprep.subr.mxu0 0.0
  %507 = vmatpush1.msra.mxu0 0.0
  %508 = vmatprep.subr.mxu0 0.0
  %509 = vmatpush1.msra.mxu0 0.0
  %510 = vmatprep.subr.mxu0 0.0
  %511 = vmatpush1.msra.mxu0 0.0
  %512 = vmatprep.subr.mxu0 0.0
  %513 = vmatpush1.msra.mxu0 0.0
  %514 = vmatprep.subr.mxu0 0.0
  %515 = vmatpush1.msra.mxu0 0.0
  %516 = vmatprep.subr.mxu0 0.0
  %517 = vmatpush1.msra.mxu0 0.0
  %518 = vmatprep.subr.mxu0 0.0
  %519 = vmatpush1.msra.mxu0 0.0
  %520 = vmatprep.subr.mxu0 0.0
  %521 = vmatpush1.msra.mxu0 0.0
  %522 = vmatprep.subr.mxu0 0.0
  %523 = vmatpush1.msra.mxu0 0.0
  %524 = vmatprep.subr.mxu0 0.0
  %525 = vmatpush1.msra.mxu0 0.0
  %526 = vmatprep.subr.mxu0 0.0
  %527 = vmatpush1.msra.mxu0 %v502
  %528 = vmatprep.subr.mxu0 0.0
  %529 = vmatpush1.msra.mxu0 %v496
  %530 = vmatprep.subr.mxu0 0.0
  %531 = vmatpush1.msra.mxu0 %v495
  %532 = vmatprep.subr.mxu0 0.0
  %533 = vmatpush1.msra.mxu0 %v494
  %534 = vmatprep.subr.mxu0 0.0
  %535 = vmatpush1.msra.mxu0 %v493
  %536 = vmatprep.subr.mxu0 0.0
  %537 = vmatpush2.msra.mxu0 0.0
  %538 = vmatprep.subr.mxu0 0.0
  %539 = vmatpush2.msra.mxu0 0.0
  %540 = vmatprep.subr.mxu0 0.0
  %541 = vmatpush2.msra.mxu0 0.0
  %542 = vmatprep.subr.mxu0 0.0
  %543 = vmatpush2.msra.mxu0 0.0
  %544 = vmatprep.subr.mxu0 0.0
  %545 = vmatpush2.msra.mxu0 0.0
  %546 = vmatprep.subr.mxu0 0.0
  %547 = vmatpush2.msra.mxu0 0.0
  %548 = vmatprep.subr.mxu0 0.0
  %549 = vmatpush2.msra.mxu0 0.0
  %550 = vmatprep.subr.mxu0 0.0
  %551 = vmatpush2.msra.mxu0 0.0
  %552 = vmatprep.subr.mxu0 0.0
  %553 = vmatpush2.msra.mxu0 0.0
  %554 = vmatprep.subr.mxu0 0.0
  %555 = vmatpush2.msra.mxu0 0.0
  %556 = vmatprep.subr.mxu0 0.0
  %557 = vmatpush2.msra.mxu0 0.0
  %558 = vmatprep.subr.mxu0 0.0
  %559 = vmatpush2.msra.mxu0 0.0
  %560 = vmatprep.subr.mxu0 0.0
  %561 = vmatpush2.msra.mxu0 0.0
  %562 = vmatprep.subr.mxu0 0.0
  %563 = vmatpush2.msra.mxu0 0.0
  %564 = vmatprep.subr.mxu0 0.0
  %565 = vmatpush2.msra.mxu0 0.0
  %566 = vmatprep.subr.mxu0 0.0
  %567 = vmatpush2.msra.mxu0 0.0
  %568 = vmatprep.mubr.f32.mxu0 0.0
  %569 = vmatmul.mubr.f32.gmra.mxu0 %v499
  %v570 = vpop.f32.mrf.mxu0
  %v571 = vadd.f32 0.0, %v570
  %v572 = vpop.f32.mrf.mxu0
  %573 = vdwg.mxu0
  %v574 = vadd.f32 %v489, %v571
  %s575 = scalar_lea.vmem %s3, 120
  %v576 = vld [vmem:[%s575] sm:$0xff]
  %v577 = vld [vmem:[%s575 + $0x8] sm:$0xff]
  %v578 = vld [vmem:[%s575 + $0x10] sm:$0xff]
  %v579 = vld [vmem:[%s575 + $0x18] sm:$0xff]
  %v580 = vld [vmem:[%s575 + $0x20] sm:$0x1]
  %v582 = vsel %vm338, %v305, 0
  %v585 = vsel %vm342, %v580, 0
  %587 = vmatprep.subr.mxu0 0.0
  %588 = vmatpush1.msra.mxu0 0.0
  %589 = vmatprep.subr.mxu0 0.0
  %590 = vmatpush1.msra.mxu0 0.0
  %591 = vmatprep.subr.mxu0 0.0
  %592 = vmatpush1.msra.mxu0 0.0
  %593 = vmatprep.subr.mxu0 0.0
  %594 = vmatpush1.msra.mxu0 0.0
  %595 = vmatprep.subr.mxu0 0.0
  %596 = vmatpush1.msra.mxu0 0.0
  %597 = vmatprep.subr.mxu0 0.0
  %598 = vmatpush1.msra.mxu0 0.0
  %599 = vmatprep.subr.mxu0 0.0
  %600 = vmatpush1.msra.mxu0 0.0
  %601 = vmatprep.subr.mxu0 0.0
  %602 = vmatpush1.msra.mxu0 0.0
  %603 = vmatprep.subr.mxu0 0.0
  %604 = vmatpush1.msra.mxu0 0.0
  %605 = vmatprep.subr.mxu0 0.0
  %606 = vmatpush1.msra.mxu0 0.0
  %607 = vmatprep.subr.mxu0 0.0
  %608 = vmatpush1.msra.mxu0 0.0
  %609 = vmatprep.subr.mxu0 0.0
  %610 = vmatpush1.msra.mxu0 %v585
  %611 = vmatprep.subr.mxu0 0.0
  %612 = vmatpush1.msra.mxu0 %v579
  %613 = vmatprep.subr.mxu0 0.0
  %614 = vmatpush1.msra.mxu0 %v578
  %615 = vmatprep.subr.mxu0 0.0
  %616 = vmatpush1.msra.mxu0 %v577
  %617 = vmatprep.subr.mxu0 0.0
  %618 = vmatpush1.msra.mxu0 %v576
  %619 = vmatprep.subr.mxu0 0.0
  %620 = vmatpush2.msra.mxu0 0.0
  %621 = vmatprep.subr.mxu0 0.0
  %622 = vmatpush2.msra.mxu0 0.0
  %623 = vmatprep.subr.mxu0 0.0
  %624 = vmatpush2.msra.mxu0 0.0
  %625 = vmatprep.subr.mxu0 0.0
  %626 = vmatpush2.msra.mxu0 0.0
  %627 = vmatprep.subr.mxu0 0.0
  %628 = vmatpush2.msra.mxu0 0.0
  %629 = vmatprep.subr.mxu0 0.0
  %630 = vmatpush2.msra.mxu0 0.0
  %631 = vmatprep.subr.mxu0 0.0
  %632 = vmatpush2.msra.mxu0 0.0
  %633 = vmatprep.subr.mxu0 0.0
  %634 = vmatpush2.msra.mxu0 0.0
  %635 = vmatprep.subr.mxu0 0.0
  %636 = vmatpush2.msra.mxu0 0.0
  %637 = vmatprep.subr.mxu0 0.0
  %638 = vmatpush2.msra.mxu0 0.0
  %639 = vmatprep.subr.mxu0 0.0
  %640 = vmatpush2.msra.mxu0 0.0
  %641 = vmatprep.subr.mxu0 0.0
  %642 = vmatpush2.msra.mxu0 0.0
  %643 = vmatprep.subr.mxu0 0.0
  %644 = vmatpush2.msra.mxu0 0.0
  %645 = vmatprep.subr.mxu0 0.0
  %646 = vmatpush2.msra.mxu0 0.0
  %647 = vmatprep.subr.mxu0 0.0
  %648 = vmatpush2.msra.mxu0 0.0
  %649 = vmatprep.subr.mxu0 0.0
  %650 = vmatpush2.msra.mxu0 0.0
  %651 = vmatprep.mubr.f32.mxu0 0.0
  %652 = vmatmul.mubr.f32.gmra.mxu0 %v582
  %v653 = vpop.f32.mrf.mxu0
  %v654 = vadd.f32 0.0, %v653
  %v655 = vpop.f32.mrf.mxu0
  %656 = vdwg.mxu0
  %v657 = vadd.f32 %v574, %v654
  %s658 = scalar_lea.vmem %s3, 160
  %v659 = vld [vmem:[%s658] sm:$0xff]
  %v660 = vld [vmem:[%s658 + $0x8] sm:$0xff]
  %v661 = vld [vmem:[%s658 + $0x10] sm:$0xff]
  %v662 = vld [vmem:[%s658 + $0x18] sm:$0xff]
  %v663 = vld [vmem:[%s658 + $0x20] sm:$0x1]
  %v665 = vsel %vm338, %v312, 0
  %v668 = vsel %vm342, %v663, 0
  %670 = vmatprep.subr.mxu0 0.0
  %671 = vmatpush1.msra.mxu0 0.0
  %672 = vmatprep.subr.mxu0 0.0
  %673 = vmatpush1.msra.mxu0 0.0
  %674 = vmatprep.subr.mxu0 0.0
  %675 = vmatpush1.msra.mxu0 0.0
  %676 = vmatprep.subr.mxu0 0.0
  %677 = vmatpush1.msra.mxu0 0.0
  %678 = vmatprep.subr.mxu0 0.0
  %679 = vmatpush1.msra.mxu0 0.0
  %680 = vmatprep.subr.mxu0 0.0
  %681 = vmatpush1.msra.mxu0 0.0
  %682 = vmatprep.subr.mxu0 0.0
  %683 = vmatpush1.msra.mxu0 0.0
  %684 = vmatprep.subr.mxu0 0.0
  %685 = vmatpush1.msra.mxu0 0.0
  %686 = vmatprep.subr.mxu0 0.0
  %687 = vmatpush1.msra.mxu0 0.0
  %688 = vmatprep.subr.mxu0 0.0
  %689 = vmatpush1.msra.mxu0 0.0
  %690 = vmatprep.subr.mxu0 0.0
  %691 = vmatpush1.msra.mxu0 0.0
  %692 = vmatprep.subr.mxu0 0.0
  %693 = vmatpush1.msra.mxu0 %v668
  %694 = vmatprep.subr.mxu0 0.0
  %695 = vmatpush1.msra.mxu0 %v662
  %696 = vmatprep.subr.mxu0 0.0
  %697 = vmatpush1.msra.mxu0 %v661
  %698 = vmatprep.subr.mxu0 0.0
  %699 = vmatpush1.msra.mxu0 %v660
  %700 = vmatprep.subr.mxu0 0.0
  %701 = vmatpush1.msra.mxu0 %v659
  %702 = vmatprep.subr.mxu0 0.0
  %703 = vmatpush2.msra.mxu0 0.0
  %704 = vmatprep.subr.mxu0 0.0
  %705 = vmatpush2.msra.mxu0 0.0
  %706 = vmatprep.subr.mxu0 0.0
  %707 = vmatpush2.msra.mxu0 0.0
  %708 = vmatprep.subr.mxu0 0.0
  %709 = vmatpush2.msra.mxu0 0.0
  %710 = vmatprep.subr.mxu0 0.0
  %711 = vmatpush2.msra.mxu0 0.0
  %712 = vmatprep.subr.mxu0 0.0
  %713 = vmatpush2.msra.mxu0 0.0
  %714 = vmatprep.subr.mxu0 0.0
  %715 = vmatpush2.msra.mxu0 0.0
  %716 = vmatprep.subr.mxu0 0.0
  %717 = vmatpush2.msra.mxu0 0.0
  %718 = vmatprep.subr.mxu0 0.0
  %719 = vmatpush2.msra.mxu0 0.0
  %720 = vmatprep.subr.mxu0 0.0
  %721 = vmatpush2.msra.mxu0 0.0
  %722 = vmatprep.subr.mxu0 0.0
  %723 = vmatpush2.msra.mxu0 0.0
  %724 = vmatprep.subr.mxu0 0.0
  %725 = vmatpush2.msra.mxu0 0.0
  %726 = vmatprep.subr.mxu0 0.0
  %727 = vmatpush2.msra.mxu0 0.0
  %728 = vmatprep.subr.mxu0 0.0
  %729 = vmatpush2.msra.mxu0 0.0
  %730 = vmatprep.subr.mxu0 0.0
  %731 = vmatpush2.msra.mxu0 0.0
  %732 = vmatprep.subr.mxu0 0.0
  %733 = vmatpush2.msra.mxu0 0.0
  %734 = vmatprep.mubr.f32.mxu0 0.0
  %735 = vmatmul.mubr.f32.gmra.mxu0 %v665
  %v736 = vpop.f32.mrf.mxu0
  %v737 = vadd.f32 0.0, %v736
  %v738 = vpop.f32.mrf.mxu0
  %739 = vdwg.mxu0
  %v740 = vadd.f32 %v657, %v737
  %s741 = scalar_lea.vmem %s3, 200
  %v742 = vld [vmem:[%s741] sm:$0xff]
  %v743 = vld [vmem:[%s741 + $0x8] sm:$0xff]
  %v744 = vld [vmem:[%s741 + $0x10] sm:$0xff]
  %v745 = vld [vmem:[%s741 + $0x18] sm:$0xff]
  %v746 = vld [vmem:[%s741 + $0x20] sm:$0x1]
  %v748 = vsel %vm338, %v319, 0
  %v751 = vsel %vm342, %v746, 0
  %753 = vmatprep.subr.mxu0 0.0
  %754 = vmatpush1.msra.mxu0 0.0
  %755 = vmatprep.subr.mxu0 0.0
  %756 = vmatpush1.msra.mxu0 0.0
  %757 = vmatprep.subr.mxu0 0.0
  %758 = vmatpush1.msra.mxu0 0.0
  %759 = vmatprep.subr.mxu0 0.0
  %760 = vmatpush1.msra.mxu0 0.0
  %761 = vmatprep.subr.mxu0 0.0
  %762 = vmatpush1.msra.mxu0 0.0
  %763 = vmatprep.subr.mxu0 0.0
  %764 = vmatpush1.msra.mxu0 0.0
  %765 = vmatprep.subr.mxu0 0.0
  %766 = vmatpush1.msra.mxu0 0.0
  %767 = vmatprep.subr.mxu0 0.0
  %768 = vmatpush1.msra.mxu0 0.0
  %769 = vmatprep.subr.mxu0 0.0
  %770 = vmatpush1.msra.mxu0 0.0
  %771 = vmatprep.subr.mxu0 0.0
  %772 = vmatpush1.msra.mxu0 0.0
  %773 = vmatprep.subr.mxu0 0.0
  %774 = vmatpush1.msra.mxu0 0.0
  %775 = vmatprep.subr.mxu0 0.0
  %776 = vmatpush1.msra.mxu0 %v751
  %777 = vmatprep.subr.mxu0 0.0
  %778 = vmatpush1.msra.mxu0 %v745
  %779 = vmatprep.subr.mxu0 0.0
  %780 = vmatpush1.msra.mxu0 %v744
  %781 = vmatprep.subr.mxu0 0.0
  %782 = vmatpush1.msra.mxu0 %v743
  %783 = vmatprep.subr.mxu0 0.0
  %784 = vmatpush1.msra.mxu0 %v742
  %785 = vmatprep.subr.mxu0 0.0
  %786 = vmatpush2.msra.mxu0 0.0
  %787 = vmatprep.subr.mxu0 0.0
  %788 = vmatpush2.msra.mxu0 0.0
  %789 = vmatprep.subr.mxu0 0.0
  %790 = vmatpush2.msra.mxu0 0.0
  %791 = vmatprep.subr.mxu0 0.0
  %792 = vmatpush2.msra.mxu0 0.0
  %793 = vmatprep.subr.mxu0 0.0
  %794 = vmatpush2.msra.mxu0 0.0
  %795 = vmatprep.subr.mxu0 0.0
  %796 = vmatpush2.msra.mxu0 0.0
  %797 = vmatprep.subr.mxu0 0.0
  %798 = vmatpush2.msra.mxu0 0.0
  %799 = vmatprep.subr.mxu0 0.0
  %800 = vmatpush2.msra.mxu0 0.0
  %801 = vmatprep.subr.mxu0 0.0
  %802 = vmatpush2.msra.mxu0 0.0
  %803 = vmatprep.subr.mxu0 0.0
  %804 = vmatpush2.msra.mxu0 0.0
  %805 = vmatprep.subr.mxu0 0.0
  %806 = vmatpush2.msra.mxu0 0.0
  %807 = vmatprep.subr.mxu0 0.0
  %808 = vmatpush2.msra.mxu0 0.0
  %809 = vmatprep.subr.mxu0 0.0
  %810 = vmatpush2.msra.mxu0 0.0
  %811 = vmatprep.subr.mxu0 0.0
  %812 = vmatpush2.msra.mxu0 0.0
  %813 = vmatprep.subr.mxu0 0.0
  %814 = vmatpush2.msra.mxu0 0.0
  %815 = vmatprep.subr.mxu0 0.0
  %816 = vmatpush2.msra.mxu0 0.0
  %817 = vmatprep.mubr.f32.mxu0 0.0
  %818 = vmatmul.mubr.f32.gmra.mxu0 %v748
  %v819 = vpop.f32.mrf.mxu0
  %v820 = vadd.f32 0.0, %v819
  %v821 = vpop.f32.mrf.mxu0
  %822 = vdwg.mxu0
  %v823 = vadd.f32 %v740, %v820
  %s824 = scalar_lea.vmem %s3, 240
  %v825 = vld [vmem:[%s824] sm:$0xff]
  %v826 = vld [vmem:[%s824 + $0x8] sm:$0xff]
  %v827 = vld [vmem:[%s824 + $0x10] sm:$0xff]
  %v828 = vld [vmem:[%s824 + $0x18] sm:$0xff]
  %v829 = vld [vmem:[%s824 + $0x20] sm:$0x1]
  %v831 = vsel %vm338, %v326, 0
  %v834 = vsel %vm342, %v829, 0
  %836 = vmatprep.subr.mxu0 0.0
  %837 = vmatpush1.msra.mxu0 0.0
  %838 = vmatprep.subr.mxu0 0.0
  %839 = vmatpush1.msra.mxu0 0.0
  %840 = vmatprep.subr.mxu0 0.0
  %841 = vmatpush1.msra.mxu0 0.0
  %842 = vmatprep.subr.mxu0 0.0
  %843 = vmatpush1.msra.mxu0 0.0
  %844 = vmatprep.subr.mxu0 0.0
  %845 = vmatpush1.msra.mxu0 0.0
  %846 = vmatprep.subr.mxu0 0.0
  %847 = vmatpush1.msra.mxu0 0.0
  %848 = vmatprep.subr.mxu0 0.0
  %849 = vmatpush1.msra.mxu0 0.0
  %850 = vmatprep.subr.mxu0 0.0
  %851 = vmatpush1.msra.mxu0 0.0
  %852 = vmatprep.subr.mxu0 0.0
  %853 = vmatpush1.msra.mxu0 0.0
  %854 = vmatprep.subr.mxu0 0.0
  %855 = vmatpush1.msra.mxu0 0.0
  %856 = vmatprep.subr.mxu0 0.0
  %857 = vmatpush1.msra.mxu0 0.0
  %858 = vmatprep.subr.mxu0 0.0
  %859 = vmatpush1.msra.mxu0 %v834
  %860 = vmatprep.subr.mxu0 0.0
  %861 = vmatpush1.msra.mxu0 %v828
  %862 = vmatprep.subr.mxu0 0.0
  %863 = vmatpush1.msra.mxu0 %v827
  %864 = vmatprep.subr.mxu0 0.0
  %865 = vmatpush1.msra.mxu0 %v826
  %866 = vmatprep.subr.mxu0 0.0
  %867 = vmatpush1.msra.mxu0 %v825
  %868 = vmatprep.subr.mxu0 0.0
  %869 = vmatpush2.msra.mxu0 0.0
  %870 = vmatprep.subr.mxu0 0.0
  %871 = vmatpush2.msra.mxu0 0.0
  %872 = vmatprep.subr.mxu0 0.0
  %873 = vmatpush2.msra.mxu0 0.0
  %874 = vmatprep.subr.mxu0 0.0
  %875 = vmatpush2.msra.mxu0 0.0
  %876 = vmatprep.subr.mxu0 0.0
  %877 = vmatpush2.msra.mxu0 0.0
  %878 = vmatprep.subr.mxu0 0.0
  %879 = vmatpush2.msra.mxu0 0.0
  %880 = vmatprep.subr.mxu0 0.0
  %881 = vmatpush2.msra.mxu0 0.0
  %882 = vmatprep.subr.mxu0 0.0
  %883 = vmatpush2.msra.mxu0 0.0
  %884 = vmatprep.subr.mxu0 0.0
  %885 = vmatpush2.msra.mxu0 0.0
  %886 = vmatprep.subr.mxu0 0.0
  %887 = vmatpush2.msra.mxu0 0.0
  %888 = vmatprep.subr.mxu0 0.0
  %889 = vmatpush2.msra.mxu0 0.0
  %890 = vmatprep.subr.mxu0 0.0
  %891 = vmatpush2.msra.mxu0 0.0
  %892 = vmatprep.subr.mxu0 0.0
  %893 = vmatpush2.msra.mxu0 0.0
  %894 = vmatprep.subr.mxu0 0.0
  %895 = vmatpush2.msra.mxu0 0.0
  %896 = vmatprep.subr.mxu0 0.0
  %897 = vmatpush2.msra.mxu0 0.0
  %898 = vmatprep.subr.mxu0 0.0
  %899 = vmatpush2.msra.mxu0 0.0
  %900 = vmatprep.mubr.f32.mxu0 0.0
  %901 = vmatmul.mubr.f32.gmra.mxu0 %v831
  %v902 = vpop.f32.mrf.mxu0
  %v903 = vadd.f32 0.0, %v902
  %v904 = vpop.f32.mrf.mxu0
  %905 = vdwg.mxu0
  %v906 = vadd.f32 %v823, %v903
  %v907 = vld [vmem:[%s4] sm:$0x1]
  %v909 = vlaneseq
  %v910 = vshrl.u32 %v909, 7
  %v911 = vsub.s32 0, %v910
  %v912 = vrot.slane %v907, %v911
  %v914 = vadd.f32 %v906, %v912
  %v915 = vmax.f32 %v914, 0.0
  %v916 = vld [vmem:[%s5] sm:$0xff]
  %v917 = vld [vmem:[%s5 + $0x8] sm:$0xff]
  %v918 = vld [vmem:[%s5 + $0x10] sm:$0xff]
  %v919 = vld [vmem:[%s5 + $0x18] sm:$0xff]
  %v920 = vld [vmem:[%s6] sm:$0x1]
  %v922 = vlaneseq
  %v923 = vshrl.u32 %v922, 7
  %v924 = vsub.s32 0, %v923
  %v925 = vrot.slane %v920, %v924
  %vm927 = vcmask 261120
  %v929 = vsel %vm927, %v915, 0
  %931 = vmatprep.subr.mxu0 0.0
  %932 = vmatpush1.msra.mxu0 0.0
  %933 = vmatprep.subr.mxu0 0.0
  %934 = vmatpush1.msra.mxu0 0.0
  %935 = vmatprep.subr.mxu0 0.0
  %936 = vmatpush1.msra.mxu0 0.0
  %937 = vmatprep.subr.mxu0 0.0
  %938 = vmatpush1.msra.mxu0 0.0
  %939 = vmatprep.subr.mxu0 0.0
  %940 = vmatpush1.msra.mxu0 0.0
  %941 = vmatprep.subr.mxu0 0.0
  %942 = vmatpush1.msra.mxu0 0.0
  %943 = vmatprep.subr.mxu0 0.0
  %944 = vmatpush1.msra.mxu0 0.0
  %945 = vmatprep.subr.mxu0 0.0
  %946 = vmatpush1.msra.mxu0 0.0
  %947 = vmatprep.subr.mxu0 0.0
  %948 = vmatpush1.msra.mxu0 0.0
  %949 = vmatprep.subr.mxu0 0.0
  %950 = vmatpush1.msra.mxu0 0.0
  %951 = vmatprep.subr.mxu0 0.0
  %952 = vmatpush1.msra.mxu0 0.0
  %953 = vmatprep.subr.mxu0 0.0
  %954 = vmatpush1.msra.mxu0 0.0
  %955 = vmatprep.subr.mxu0 0.0
  %956 = vmatpush1.msra.mxu0 %v919
  %957 = vmatprep.subr.mxu0 0.0
  %958 = vmatpush1.msra.mxu0 %v918
  %959 = vmatprep.subr.mxu0 0.0
  %960 = vmatpush1.msra.mxu0 %v917
  %961 = vmatprep.subr.mxu0 0.0
  %962 = vmatpush1.msra.mxu0 %v916
  %963 = vmatprep.subr.mxu0 0.0
  %964 = vmatpush2.msra.mxu0 0.0
  %965 = vmatprep.subr.mxu0 0.0
  %966 = vmatpush2.msra.mxu0 0.0
  %967 = vmatprep.subr.mxu0 0.0
  %968 = vmatpush2.msra.mxu0 0.0
  %969 = vmatprep.subr.mxu0 0.0
  %970 = vmatpush2.msra.mxu0 0.0
  %971 = vmatprep.subr.mxu0 0.0
  %972 = vmatpush2.msra.mxu0 0.0
  %973 = vmatprep.subr.mxu0 0.0
  %974 = vmatpush2.msra.mxu0 0.0
  %975 = vmatprep.subr.mxu0 0.0
  %976 = vmatpush2.msra.mxu0 0.0
  %977 = vmatprep.subr.mxu0 0.0
  %978 = vmatpush2.msra.mxu0 0.0
  %979 = vmatprep.subr.mxu0 0.0
  %980 = vmatpush2.msra.mxu0 0.0
  %981 = vmatprep.subr.mxu0 0.0
  %982 = vmatpush2.msra.mxu0 0.0
  %983 = vmatprep.subr.mxu0 0.0
  %984 = vmatpush2.msra.mxu0 0.0
  %985 = vmatprep.subr.mxu0 0.0
  %986 = vmatpush2.msra.mxu0 0.0
  %987 = vmatprep.subr.mxu0 0.0
  %988 = vmatpush2.msra.mxu0 0.0
  %989 = vmatprep.subr.mxu0 0.0
  %990 = vmatpush2.msra.mxu0 0.0
  %991 = vmatprep.subr.mxu0 0.0
  %992 = vmatpush2.msra.mxu0 0.0
  %993 = vmatprep.subr.mxu0 0.0
  %994 = vmatpush2.msra.mxu0 0.0
  %995 = vmatprep.mubr.f32.mxu0 0.0
  %996 = vmatmul.mubr.f32.gmra.mxu0 %v929
  %v997 = vpop.f32.mrf.mxu0
  %v998 = vadd.f32 %v925, %v997
  %v999 = vpop.f32.mrf.mxu0
  %1000 = vdwg.mxu0
  %vm1001 = vcmask 80896
  %1002 = vst.msk [vmem:[%s7] sm:$0xff] %vm1001, %v998
  // Predicated region
  $region30: #{spectrogram_forward.1} parent=0 // pred_check
    _
  $region31: #{spectrogram_forward.1} parent=0 // pred_check_branch
    %1004 = sbr.rel (0) target = $region33
  $region32: #{spectrogram_forward.1} parent=0 // pred_region
    _
  $region33: #{spectrogram_forward.1} parent=0 // pred_fallthru
    _
  // Predicated region
  $region34: #{spectrogram_forward.1} parent=0 // pred_check
    _
  $region35: #{spectrogram_forward.1} parent=0 // pred_check_branch
    %1006 = sbr.rel (0) target = $region37
  $region36: #{spectrogram_forward.1} parent=0 // pred_region
    _
  $region37: #{spectrogram_forward.1} parent=0 // pred_fallthru
    _

</llo_original>
